<compile_context>
chip_gen: v6e
topology: v6e:2x2x1
jax: 0.10.0
libtpu: 0.0.40
codegen_flags: <defaults>
</compile_context>

<pallas_src>
import math

import jax
import jax.numpy as jnp
from jax import lax
from jax.experimental import pallas as pl
from jax.experimental.pallas import tpu as pltpu

_HIDDEN = 64
_LANE = 128


def _round_up(a, b):
    return ((a + b - 1) // b) * b


def _mlp_kernel(x_ref, w1_ref, b1_ref, w2_ref, b2_ref, o_ref):
    # Layer 1: Linear(input_size, 64) with eval-mode BatchNorm folded into w1/b1.
    x = x_ref[...]
    h = jnp.dot(x, w1_ref[...], preferred_element_type=jnp.float32) + b1_ref[...]

    # Exact GELU (PyTorch default): 0.5 * x * (1 + erf(x / sqrt(2)))
    h = 0.5 * h * (1.0 + lax.erf(h * (1.0 / math.sqrt(2.0))))

    # Dropout: identity in eval mode.

    # Layer 2: Linear(64, out). Computed lane-dense (w2 zero-padded to 128 cols in VMEM),
    # but only the real out_dim columns are stored to HBM (no padded writeback).
    out = jnp.dot(h, w2_ref[...], preferred_element_type=jnp.float32) + b2_ref[...]
    o_ref[...] = out[:, : o_ref.shape[1]].astype(o_ref.dtype)


def _choose_tile_b(batch, in_dim, out_dim, *, max_tile_b=8192, vmem_budget_bytes=20 << 20):
    """Pick the batch tile from a per-step VMEM budget (fp32, lane-padded):
    double-buffered x and out tiles + hidden activation.  20 MiB keeps comfortable
    headroom under the 32 MiB scoped-VMEM default on every generation (per-TC on v7x)."""
    in_cols = _round_up(in_dim, _LANE)
    out_cols = _round_up(out_dim, _LANE)
    hid_cols = _round_up(_HIDDEN, _LANE)
    per_row_bytes = 4 * (2 * (in_cols + out_cols) + hid_cols)
    cap = vmem_budget_bytes // per_row_bytes
    cap = max(8, min(max_tile_b, (cap // 8) * 8))
    if batch <= cap:
        return batch  # single tile; block shape == full array dims (always legal)
    # Spread rows over the minimal number of tiles so padded-row waste stays < 8 per tile.
    n_tiles = pl.cdiv(batch, cap)
    return min(cap, _round_up(pl.cdiv(batch, n_tiles), 8))


def network_forward(x, kparams, *, max_tile_b=8192):
    """x: [B, 1, input_size] (or anything whose size-1 non-batch axes squeeze to [B, F])."""
    # x.squeeze() equivalent, restricted to size-1 non-batch axes (robust for batch==1).
    squeeze_axes = tuple(i for i in range(1, x.ndim) if x.shape[i] == 1)
    x2d = jnp.squeeze(x, axis=squeeze_axes) if squeeze_axes else x
    assert x2d.ndim == 2, f"expected 2D activations after squeeze, got {x2d.shape}"
    x2d = x2d.astype(jnp.float32)

    w1, b1 = kparams["w1f"], kparams["b1f"]   # BN folded
    w2, b2 = kparams["w2p"], kparams["b2p"]   # lane-padded to 128 columns (compute only)
    out_dim = kparams["out_dim"]

    batch, in_dim = x2d.shape
    out_p = w2.shape[1]

    tile_b = _choose_tile_b(batch, in_dim, out_dim, max_tile_b=max_tile_b)
    # Ragged last block (if any) is handled by Pallas partial-block masking:
    # OOB input reads are padded, OOB output writes are dropped — no wrapper pad/slice.
    grid = (pl.cdiv(batch, tile_b),)

    flops = 2 * batch * (in_dim * _HIDDEN + _HIDDEN * out_p)
    bytes_accessed = 4 * (
        batch * in_dim + batch * out_dim          # true (un-padded) activation traffic
        + in_dim * _HIDDEN + _HIDDEN + _HIDDEN * out_p + out_p
    )
    cost = pl.CostEstimate(
        flops=flops,
        transcendentals=batch * _HIDDEN,
        bytes_accessed=bytes_accessed,
    )

    out = pl.pallas_call(
        _mlp_kernel,
        out_shape=jax.ShapeDtypeStruct((batch, out_dim), jnp.float32),
        grid=grid,
        in_specs=[
            pl.BlockSpec((tile_b, in_dim), lambda i: (i, 0)),    # x: tiled over batch
            pl.BlockSpec((in_dim, _HIDDEN), lambda i: (0, 0)),   # w1 (resident)
            pl.BlockSpec((1, _HIDDEN), lambda i: (0, 0)),        # b1 (resident)
            pl.BlockSpec((_HIDDEN, out_p), lambda i: (0, 0)),    # w2 (resident, padded)
            pl.BlockSpec((1, out_p), lambda i: (0, 0)),          # b2 (resident, padded)
        ],
        out_specs=pl.BlockSpec((tile_b, out_dim), lambda i: (i, 0)),  # un-padded output
        compiler_params=pltpu.CompilerParams(
            dimension_semantics=("parallel",),
        ),
        cost_estimate=cost,
    )(x2d, w1, b1, w2, b2)

    return out


def init_params(key, input_size, output_size, hidden=_HIDDEN, eps=1e-5):
    """Deterministic parameter init matching the module's initialize_weights():
    Linear weights ~ kaiming_uniform_ (fan_in, a=0 -> bound = sqrt(6/fan_in)),
    Linear biases = 0, BN gamma=1, beta=0, running_mean=0, running_var=1."""
    k1, k2 = jax.random.split(key)

    def kaiming_uniform(k, fan_in, fan_out):
        bound = math.sqrt(6.0 / fan_in)
        # Stored as [in, out] (transposed vs. PyTorch's [out, in]) for x @ W.
        return jax.random.uniform(
            k, (fan_in, fan_out), dtype=jnp.float32, minval=-bound, maxval=bound
        )

    return dict(
        w1=kaiming_uniform(k1, input_size, hidden),
        b1=jnp.zeros((hidden,), jnp.float32),
        gamma=jnp.ones((hidden,), jnp.float32),
        beta=jnp.zeros((hidden,), jnp.float32),
        running_mean=jnp.zeros((hidden,), jnp.float32),
        running_var=jnp.ones((hidden,), jnp.float32),
        w2=kaiming_uniform(k2, hidden, output_size),
        b2=jnp.zeros((output_size,), jnp.float32),
        eps=eps,
    )


def prepare_kernel_params(p):
    """One-time parameter transform: fold eval-mode BatchNorm into (w1, b1) and
    zero-pad the second Linear to a lane-dense (128-column) layout for compute only."""
    scale = p["gamma"] / jnp.sqrt(p["running_var"] + p["eps"])     # [hidden]
    shift = p["beta"] - p["running_mean"] * scale                  # [hidden]
    w1f = p["w1"] * scale[None, :]                                 # [in, hidden]
    b1f = (p["b1"] * scale + shift)[None, :]                       # [1, hidden]

    out_dim = p["w2"].shape[1]
    out_p = max(_LANE, _round_up(out_dim, _LANE))
    w2p = jnp.pad(p["w2"], ((0, 0), (0, out_p - out_dim)))         # [hidden, out_p]
    b2p = jnp.pad(p["b2"], ((0, out_p - out_dim),))[None, :]       # [1, out_p]

    return dict(w1f=w1f, b1f=b1f, w2p=w2p, b2p=b2p, out_dim=out_dim)


def _reference_forward(x, p):
    """Pure-JAX reference (same eval-mode semantics) for a sanity check."""
    squeeze_axes = tuple(i for i in range(1, x.ndim) if x.shape[i] == 1)
    x2d = (jnp.squeeze(x, axis=squeeze_axes) if squeeze_axes else x).astype(jnp.float32)
    h = x2d @ p["w1"] + p["b1"][None, :]
    scale = p["gamma"] / jnp.sqrt(p["running_var"] + p["eps"])
    shift = p["beta"] - p["running_mean"] * scale
    h = h * scale[None, :] + shift[None, :]
    h = 0.5 * h * (1.0 + lax.erf(h / math.sqrt(2.0)))
    return h @ p["w2"] + p["b2"][None, :]


if __name__ == "__main__":
    input_size = 32
    output_size = 16

    key = jax.random.PRNGKey(0)
    kx1, kx2, kp = jax.random.split(key, 3)

    params = init_params(kp, input_size, output_size)
    kernel_params = prepare_kernel_params(params)

    # Test 1: small tile-aligned batch (single grid step, no padding anywhere).
    batch = 8
    x = jax.random.normal(kx1, (batch, 1, input_size), dtype=jnp.float32)
    out = jax.block_until_ready(network_forward(x, kernel_params))
    ref = _reference_forward(x, params)
    assert out.shape == (batch, output_size)
    assert jnp.allclose(out, ref, atol=1e-4, rtol=1e-4)

    # Test 2: ragged batch with a forced small tile to exercise the partial last block
    # (grid = cdiv(20, 8) = 3; last block's extra rows are masked on writeback).
    batch2 = 20
    x2 = jax.random.normal(kx2, (batch2, 1, input_size), dtype=jnp.float32)
    out2 = jax.block_until_ready(network_forward(x2, kernel_params, max_tile_b=8))
    ref2 = _reference_forward(x2, params)
    assert out2.shape == (batch2, output_size)
    assert jnp.allclose(out2, ref2, atol=1e-4, rtol=1e-4)

    print("KERNEL_OK")
</pallas_src>

<mosaic_0001>
module attributes {stable_mosaic.version = 11 : i64} {
  func.func @_mlp_kernel(%arg0: i32, %arg1: memref<8x32xf32, #tpu.memory_space<vmem>>, %arg2: memref<32x64xf32, #tpu.memory_space<vmem>>, %arg3: memref<1x64xf32, #tpu.memory_space<vmem>>, %arg4: memref<64x128xf32, #tpu.memory_space<vmem>>, %arg5: memref<1x128xf32, #tpu.memory_space<vmem>>, %arg6: memref<8x16xf32, #tpu.memory_space<vmem>>) attributes {dimension_semantics = [#tpu.dimension_semantics<parallel>], iteration_bounds = array<i64: 1>, scalar_prefetch = 0 : i64, scratch_operands = 0 : i64, tpu.core_type = #tpu.core_type<tc>, window_params = [{transform_indices = @transform_0, window_bounds = array<i64: 8, 32>}, {pipeline_mode = #tpu.pipeline_mode<synchronous>, transform_indices = @transform_1, window_bounds = array<i64: 32, 64>}, {pipeline_mode = #tpu.pipeline_mode<synchronous>, transform_indices = @transform_2, window_bounds = array<i64: 1, 64>}, {pipeline_mode = #tpu.pipeline_mode<synchronous>, transform_indices = @transform_3, window_bounds = array<i64: 64, 128>}, {pipeline_mode = #tpu.pipeline_mode<synchronous>, transform_indices = @transform_4, window_bounds = array<i64: 1, 128>}, {transform_indices = @transform_5, window_bounds = array<i64: 8, 16>}]} {
    %c0 = arith.constant 0 : index
    %c0_0 = arith.constant 0 : index
    %0 = vector.load %arg1[%c0, %c0_0] : memref<8x32xf32, #tpu.memory_space<vmem>>, vector<8x32xf32>
    %c0_1 = arith.constant 0 : index
    %c0_2 = arith.constant 0 : index
    %1 = vector.load %arg2[%c0_1, %c0_2] : memref<32x64xf32, #tpu.memory_space<vmem>>, vector<32x64xf32>
    %cst = arith.constant dense<0.000000e+00> : vector<8x64xf32>
    %2 = tpu.matmul %0, %1, %cst {dimension_numbers = #tpu.dot_dimension_numbers<[1], [0], [0], [1], [0, 0, 1, 1], [], []>} : vector<8x32xf32>, vector<32x64xf32>, vector<8x64xf32> -> vector<8x64xf32>
    %c0_3 = arith.constant 0 : index
    %c0_4 = arith.constant 0 : index
    %3 = vector.load %arg3[%c0_3, %c0_4] : memref<1x64xf32, #tpu.memory_space<vmem>>, vector<1x64xf32>
    %4 = vector.broadcast %3 : vector<1x64xf32> to vector<8x64xf32>
    %5 = arith.addf %2, %4 : vector<8x64xf32>
    %cst_5 = arith.constant 5.000000e-01 : f32
    %6 = vector.broadcast %cst_5 : f32 to vector<8x64xf32>
    %7 = arith.mulf %6, %5 : vector<8x64xf32>
    %cst_6 = arith.constant 0.707106769 : f32
    %8 = vector.broadcast %cst_6 : f32 to vector<8x64xf32>
    %9 = arith.mulf %5, %8 : vector<8x64xf32>
    %10 = math.erf %9 : vector<8x64xf32>
    %cst_7 = arith.constant 1.000000e+00 : f32
    %11 = vector.broadcast %cst_7 : f32 to vector<8x64xf32>
    %12 = arith.addf %11, %10 : vector<8x64xf32>
    %13 = arith.mulf %7, %12 : vector<8x64xf32>
    %c0_8 = arith.constant 0 : index
    %c0_9 = arith.constant 0 : index
    %14 = vector.load %arg4[%c0_8, %c0_9] : memref<64x128xf32, #tpu.memory_space<vmem>>, vector<64x128xf32>
    %cst_10 = arith.constant dense<0.000000e+00> : vector<8x128xf32>
    %15 = tpu.matmul %13, %14, %cst_10 {dimension_numbers = #tpu.dot_dimension_numbers<[1], [0], [0], [1], [0, 0, 1, 1], [], []>} : vector<8x64xf32>, vector<64x128xf32>, vector<8x128xf32> -> vector<8x128xf32>
    %c0_11 = arith.constant 0 : index
    %c0_12 = arith.constant 0 : index
    %16 = vector.load %arg5[%c0_11, %c0_12] : memref<1x128xf32, #tpu.memory_space<vmem>>, vector<1x128xf32>
    %17 = vector.broadcast %16 : vector<1x128xf32> to vector<8x128xf32>
    %18 = arith.addf %15, %17 : vector<8x128xf32>
    %19 = vector.extract_strided_slice %18 {offsets = [0, 0], sizes = [8, 16], strides = [1, 1]} : vector<8x128xf32> to vector<8x16xf32>
    %c0_13 = arith.constant 0 : index
    %c0_14 = arith.constant 0 : index
    %20 = vector.load %arg6[%c0_13, %c0_14] : memref<8x16xf32, #tpu.memory_space<vmem>>, vector<8x16xf32>
    tpu.vector_store %arg6[%c0_13, %c0_14], %19 {strides = array<i32>} : memref<8x16xf32, #tpu.memory_space<vmem>>, vector<8x16xf32>,
    return
  }
  func.func @transform_0(%arg0: i32) -> (i32, i32) {
    %c0_i32 = arith.constant 0 : i32
    %c0_i32_0 = arith.constant 0 : i32
    return %arg0, %c0_i32 : i32, i32
  }
  func.func @transform_1(%arg0: i32) -> (i32, i32) {
    %c0_i32 = arith.constant 0 : i32
    %c0_i32_0 = arith.constant 0 : i32
    %c0_i32_1 = arith.constant 0 : i32
    return %c0_i32, %c0_i32_0 : i32, i32
  }
  func.func @transform_2(%arg0: i32) -> (i32, i32) {
    %c0_i32 = arith.constant 0 : i32
    %c0_i32_0 = arith.constant 0 : i32
    %c0_i32_1 = arith.constant 0 : i32
    return %c0_i32, %c0_i32_0 : i32, i32
  }
  func.func @transform_3(%arg0: i32) -> (i32, i32) {
    %c0_i32 = arith.constant 0 : i32
    %c0_i32_0 = arith.constant 0 : i32
    %c0_i32_1 = arith.constant 0 : i32
    return %c0_i32, %c0_i32_0 : i32, i32
  }
  func.func @transform_4(%arg0: i32) -> (i32, i32) {
    %c0_i32 = arith.constant 0 : i32
    %c0_i32_0 = arith.constant 0 : i32
    %c0_i32_1 = arith.constant 0 : i32
    return %c0_i32, %c0_i32_0 : i32, i32
  }
  func.func @transform_5(%arg0: i32) -> (i32, i32) {
    %c0_i32 = arith.constant 0 : i32
    %c0_i32_0 = arith.constant 0 : i32
    return %arg0, %c0_i32 : i32, i32
  }
}

</mosaic_0001>

<llo_original>
// kernel: tpu_custom_call.1
$region0: #{tpu_custom_call.1}
  #allocation0 [shape = 'u32[]', space=smem, size = 0x4, offset = 0x4, fixed_abs, tag = 'smem constant byte address 0x4 - core index']
  #allocation1 [shape = 'u32[144,128]{1,0:T(1,128)}', space=vmem, size = 0x12000, scoped, tag = 'internal scratch']
  %s0 = inlined_call_operand.hbm [shape: f32[8,32], index: 0, kind: input, shape index: {}]
  %s1 = inlined_call_operand.hbm [shape: f32[32,64], index: 1, kind: input, shape index: {}]
  %s2 = inlined_call_operand.vmem [shape: f32[1,64], index: 2, kind: input, shape index: {}]
  %s3 = inlined_call_operand.hbm [shape: f32[64,128], index: 3, kind: input, shape index: {}]
  %s4 = inlined_call_operand.vmem [shape: f32[1,128], index: 4, kind: input, shape index: {}]
  %s5 = inlined_call_operand.hbm [shape: f32[8,16], index: 5, kind: output, shape index: {}]
  %s6 = sld [smem:[#allocation0]]
  $region42: #{tpu_custom_call.1} parent=0
    _
  %s8 = ssub.s32 1, %s6
  %s9 = scalar_select 0, %s8, %s6
  $region1: #{tpu_custom_call.1} parent=0
    #allocation2 [shape = 'u8[4096]{0}', space=vmem, size = 0x1000, scoped, tag = 'input window, operand 0, single buffered']
    #allocation3 [shape = 's32[1]{0}', space=sflag, size = 0x4, scoped, tag = 'scoped memory for tpu_custom_call.1']
    #allocation4 [shape = 's32[1]{0}', space=sflag, size = 0x4, scoped, tag = 'scoped memory for tpu_custom_call.1']
    #allocation5 [shape = 'u8[16384]{0}', space=vmem, size = 0x4000, scoped, tag = 'input window, operand 1, single buffered']
    #allocation6 [shape = 's32[1]{0}', space=sflag, size = 0x4, scoped, tag = 'scoped memory for tpu_custom_call.1']
    #allocation7 [shape = 'u8[32768]{0}', space=vmem, size = 0x8000, scoped, tag = 'input window, operand 3, single buffered']
    #allocation8 [shape = 'u8[4096]{0}', space=vmem, size = 0x1000, scoped, tag = 'output window, operand 0, single buffered']
    %10 = vsyncpa [#allocation3], 0
    %11 = vsyncpa [#allocation6], 0
    %12 = vsyncpa [#allocation4], 0
    // Predicated region
    $region2: #{tpu_custom_call.1} parent=1 // pred_check
      _
    $region3: #{tpu_custom_call.1} parent=1 // pred_check_branch
      %14 = sbr.rel (0) target = $region5
    $region4: #{tpu_custom_call.1} parent=1 // pred_region
      %s16 = ssub.s32 128, 128
      %17 = vsyncadd [#allocation3], %s16
      %s19 = sshll.u32 [#allocation2], 4
      %s20 = int_to_ptr.vmem [resolvable:$true] %s19
      %22 = dma.hbm_to_vmem [thread:$0]  %s0, 128, %s20, [#allocation3]
    $region5: #{tpu_custom_call.1} parent=1 // pred_fallthru
      _
    // Predicated region
    $region6: #{tpu_custom_call.1} parent=1 // pred_check
      _
    $region7: #{tpu_custom_call.1} parent=1 // pred_check_branch
      %24 = sbr.rel (0) target = $region9
    $region8: #{tpu_custom_call.1} parent=1 // pred_region
      %s26 = ssub.s32 512, 512
      %27 = vsyncadd [#allocation6], %s26
      %s28 = sshll.u32 [#allocation5], 4
      %s29 = int_to_ptr.vmem [resolvable:$true] %s28
      %34 = dma.hbm_to_vmem [thread:$0]  %s1, 512, %s29, [#allocation6], 128, 128, 8
    $region9: #{tpu_custom_call.1} parent=1 // pred_fallthru
      _
    // Predicated region
    $region10: #{tpu_custom_call.1} parent=1 // pred_check
      _
    $region11: #{tpu_custom_call.1} parent=1 // pred_check_branch
      %36 = sbr.rel (0) target = $region13
    $region12: #{tpu_custom_call.1} parent=1 // pred_region
      _
    $region13: #{tpu_custom_call.1} parent=1 // pred_fallthru
      _
    // Predicated region
    $region14: #{tpu_custom_call.1} parent=1 // pred_check
      _
    $region15: #{tpu_custom_call.1} parent=1 // pred_check_branch
      %38 = sbr.rel (0) target = $region17
    $region16: #{tpu_custom_call.1} parent=1 // pred_region
      %s40 = ssub.s32 1024, 1024
      %41 = vsyncadd [#allocation6], %s40
      %s42 = sshll.u32 [#allocation7], 4
      %s43 = int_to_ptr.vmem [resolvable:$true] %s42
      %48 = dma.hbm_to_vmem [thread:$0]  %s3, 1024, %s43, [#allocation6], 128, 128, 8
    $region17: #{tpu_custom_call.1} parent=1 // pred_fallthru
      _
    // Predicated region
    $region18: #{tpu_custom_call.1} parent=1 // pred_check
      _
    $region19: #{tpu_custom_call.1} parent=1 // pred_check_branch
      %50 = sbr.rel (0) target = $region21
    $region20: #{tpu_custom_call.1} parent=1 // pred_region
      _
    $region21: #{tpu_custom_call.1} parent=1 // pred_fallthru
      _
    // Predicated region
    $region22: #{tpu_custom_call.1} parent=1 // pred_check
      _
    $region23: #{tpu_custom_call.1} parent=1 // pred_check_branch
      %52 = sbr.rel (0) target = $region25
    $region24: #{tpu_custom_call.1} parent=1 // pred_region
      %53 = dma.done [#allocation3], 128
    $region25: #{tpu_custom_call.1} parent=1 // pred_fallthru
      _
    // Predicated region
    $region26: #{tpu_custom_call.1} parent=1 // pred_check
      _
    $region27: #{tpu_custom_call.1} parent=1 // pred_check_branch
      %55 = sbr.rel (0) target = $region29
    $region28: #{tpu_custom_call.1} parent=1 // pred_region
      %56 = dma.done [#allocation6], 512
    $region29: #{tpu_custom_call.1} parent=1 // pred_fallthru
      _
    // Predicated region
    $region30: #{tpu_custom_call.1} parent=1 // pred_check
      _
    $region31: #{tpu_custom_call.1} parent=1 // pred_check_branch
      %58 = sbr.rel (0) target = $region33
    $region32: #{tpu_custom_call.1} parent=1 // pred_region
      %59 = dma.done [#allocation6], 1024
    $region33: #{tpu_custom_call.1} parent=1 // pred_fallthru
      _
    %v60 = vld [vmem:[#allocation2] sm:$0xff]
    %v61 = vld [vmem:[#allocation5] sm:$0xff]
    %v62 = vld [vmem:[#allocation5 + $0x8] sm:$0xff]
    %v63 = vld [vmem:[#allocation5 + $0x10] sm:$0xff]
    %v64 = vld [vmem:[#allocation5 + $0x18] sm:$0xff]
    %v65 = vld [vmem:[%s2] sm:$0x1]
    %v67 = vlaneseq
    %v68 = vshrl.u32 %v67, 7
    %v69 = vsub.s32 0, %v68
    %v70 = vrot.slane %v65, %v69
    %vm72 = vcmask 261120
    %v74 = vsel %vm72, %v60, 0
    %76 = vmatprep.subr.mxu0 0.0
    %77 = vmatpush1.msra.mxu0 0.0
    %78 = vmatprep.subr.mxu0 0.0
    %79 = vmatpush1.msra.mxu0 0.0
    %80 = vmatprep.subr.mxu0 0.0
    %81 = vmatpush1.msra.mxu0 0.0
    %82 = vmatprep.subr.mxu0 0.0
    %83 = vmatpush1.msra.mxu0 0.0
    %84 = vmatprep.subr.mxu0 0.0
    %85 = vmatpush1.msra.mxu0 0.0
    %86 = vmatprep.subr.mxu0 0.0
    %87 = vmatpush1.msra.mxu0 0.0
    %88 = vmatprep.subr.mxu0 0.0
    %89 = vmatpush1.msra.mxu0 0.0
    %90 = vmatprep.subr.mxu0 0.0
    %91 = vmatpush1.msra.mxu0 0.0
    %92 = vmatprep.subr.mxu0 0.0
    %93 = vmatpush1.msra.mxu0 0.0
    %94 = vmatprep.subr.mxu0 0.0
    %95 = vmatpush1.msra.mxu0 0.0
    %96 = vmatprep.subr.mxu0 0.0
    %97 = vmatpush1.msra.mxu0 0.0
    %98 = vmatprep.subr.mxu0 0.0
    %99 = vmatpush1.msra.mxu0 0.0
    %100 = vmatprep.subr.mxu0 0.0
    %101 = vmatpush1.msra.mxu0 %v64
    %102 = vmatprep.subr.mxu0 0.0
    %103 = vmatpush1.msra.mxu0 %v63
    %104 = vmatprep.subr.mxu0 0.0
    %105 = vmatpush1.msra.mxu0 %v62
    %106 = vmatprep.subr.mxu0 0.0
    %107 = vmatpush1.msra.mxu0 %v61
    %108 = vmatprep.subr.mxu0 0.0
    %109 = vmatpush2.msra.mxu0 0.0
    %110 = vmatprep.subr.mxu0 0.0
    %111 = vmatpush2.msra.mxu0 0.0
    %112 = vmatprep.subr.mxu0 0.0
    %113 = vmatpush2.msra.mxu0 0.0
    %114 = vmatprep.subr.mxu0 0.0
    %115 = vmatpush2.msra.mxu0 0.0
    %116 = vmatprep.subr.mxu0 0.0
    %117 = vmatpush2.msra.mxu0 0.0
    %118 = vmatprep.subr.mxu0 0.0
    %119 = vmatpush2.msra.mxu0 0.0
    %120 = vmatprep.subr.mxu0 0.0
    %121 = vmatpush2.msra.mxu0 0.0
    %122 = vmatprep.subr.mxu0 0.0
    %123 = vmatpush2.msra.mxu0 0.0
    %124 = vmatprep.subr.mxu0 0.0
    %125 = vmatpush2.msra.mxu0 0.0
    %126 = vmatprep.subr.mxu0 0.0
    %127 = vmatpush2.msra.mxu0 0.0
    %128 = vmatprep.subr.mxu0 0.0
    %129 = vmatpush2.msra.mxu0 0.0
    %130 = vmatprep.subr.mxu0 0.0
    %131 = vmatpush2.msra.mxu0 0.0
    %132 = vmatprep.subr.mxu0 0.0
    %133 = vmatpush2.msra.mxu0 0.0
    %134 = vmatprep.subr.mxu0 0.0
    %135 = vmatpush2.msra.mxu0 0.0
    %136 = vmatprep.subr.mxu0 0.0
    %137 = vmatpush2.msra.mxu0 0.0
    %138 = vmatprep.subr.mxu0 0.0
    %139 = vmatpush2.msra.mxu0 0.0
    %140 = vmatprep.mubr.f32.mxu0 0.0
    %141 = vmatmul.mubr.f32.gmra.mxu0 %v74
    %v142 = vpop.f32.mrf.mxu0
    %v143 = vadd.f32 %v70, %v142
    %v144 = vpop.f32.mrf.mxu0
    %145 = vdwg.mxu0
    %v146 = vmul.f32 %v143, 0.5
    %v147 = vmul.f32 %v143, 0.70710677
    %v148 = verf.f32.pop %v147
    %v149 = vadd.f32 %v148, 1.0
    %v150 = vmul.f32 %v146, %v149
    %v151 = vld [vmem:[#allocation7] sm:$0xff]
    %v152 = vld [vmem:[#allocation7 + $0x8] sm:$0xff]
    %v153 = vld [vmem:[#allocation7 + $0x10] sm:$0xff]
    %v154 = vld [vmem:[#allocation7 + $0x18] sm:$0xff]
    %v155 = vld [vmem:[#allocation7 + $0x20] sm:$0xff]
    %v156 = vld [vmem:[#allocation7 + $0x28] sm:$0xff]
    %v157 = vld [vmem:[#allocation7 + $0x30] sm:$0xff]
    %v158 = vld [vmem:[#allocation7 + $0x38] sm:$0xff]
    %v159 = vld [vmem:[%s4] sm:$0x1]
    %v161 = vlaneseq
    %v162 = vshrl.u32 %v161, 7
    %v163 = vsub.s32 0, %v162
    %v164 = vrot.slane %v159, %v163
    %vm166 = vcmask 523264
    %v168 = vsel %vm166, %v150, 0
    %170 = vmatprep.subr.mxu0 0.0
    %171 = vmatpush1.msra.mxu0 0.0
    %172 = vmatprep.subr.mxu0 0.0
    %173 = vmatpush1.msra.mxu0 0.0
    %174 = vmatprep.subr.mxu0 0.0
    %175 = vmatpush1.msra.mxu0 0.0
    %176 = vmatprep.subr.mxu0 0.0
    %177 = vmatpush1.msra.mxu0 0.0
    %178 = vmatprep.subr.mxu0 0.0
    %179 = vmatpush1.msra.mxu0 0.0
    %180 = vmatprep.subr.mxu0 0.0
    %181 = vmatpush1.msra.mxu0 0.0
    %182 = vmatprep.subr.mxu0 0.0
    %183 = vmatpush1.msra.mxu0 0.0
    %184 = vmatprep.subr.mxu0 0.0
    %185 = vmatpush1.msra.mxu0 0.0
    %186 = vmatprep.subr.mxu0 0.0
    %187 = vmatpush1.msra.mxu0 %v158
    %188 = vmatprep.subr.mxu0 0.0
    %189 = vmatpush1.msra.mxu0 %v157
    %190 = vmatprep.subr.mxu0 0.0
    %191 = vmatpush1.msra.mxu0 %v156
    %192 = vmatprep.subr.mxu0 0.0
    %193 = vmatpush1.msra.mxu0 %v155
    %194 = vmatprep.subr.mxu0 0.0
    %195 = vmatpush1.msra.mxu0 %v154
    %196 = vmatprep.subr.mxu0 0.0
    %197 = vmatpush1.msra.mxu0 %v153
    %198 = vmatprep.subr.mxu0 0.0
    %199 = vmatpush1.msra.mxu0 %v152
    %200 = vmatprep.subr.mxu0 0.0
    %201 = vmatpush1.msra.mxu0 %v151
    %202 = vmatprep.subr.mxu0 0.0
    %203 = vmatpush2.msra.mxu0 0.0
    %204 = vmatprep.subr.mxu0 0.0
    %205 = vmatpush2.msra.mxu0 0.0
    %206 = vmatprep.subr.mxu0 0.0
    %207 = vmatpush2.msra.mxu0 0.0
    %208 = vmatprep.subr.mxu0 0.0
    %209 = vmatpush2.msra.mxu0 0.0
    %210 = vmatprep.subr.mxu0 0.0
    %211 = vmatpush2.msra.mxu0 0.0
    %212 = vmatprep.subr.mxu0 0.0
    %213 = vmatpush2.msra.mxu0 0.0
    %214 = vmatprep.subr.mxu0 0.0
    %215 = vmatpush2.msra.mxu0 0.0
    %216 = vmatprep.subr.mxu0 0.0
    %217 = vmatpush2.msra.mxu0 0.0
    %218 = vmatprep.subr.mxu0 0.0
    %219 = vmatpush2.msra.mxu0 0.0
    %220 = vmatprep.subr.mxu0 0.0
    %221 = vmatpush2.msra.mxu0 0.0
    %222 = vmatprep.subr.mxu0 0.0
    %223 = vmatpush2.msra.mxu0 0.0
    %224 = vmatprep.subr.mxu0 0.0
    %225 = vmatpush2.msra.mxu0 0.0
    %226 = vmatprep.subr.mxu0 0.0
    %227 = vmatpush2.msra.mxu0 0.0
    %228 = vmatprep.subr.mxu0 0.0
    %229 = vmatpush2.msra.mxu0 0.0
    %230 = vmatprep.subr.mxu0 0.0
    %231 = vmatpush2.msra.mxu0 0.0
    %232 = vmatprep.subr.mxu0 0.0
    %233 = vmatpush2.msra.mxu0 0.0
    %234 = vmatprep.mubr.f32.mxu0 0.0
    %235 = vmatmul.mubr.f32.gmra.mxu0 %v168
    %v236 = vpop.f32.mrf.mxu0
    %v237 = vadd.f32 %v164, %v236
    %v238 = vpop.f32.mrf.mxu0
    %239 = vdwg.mxu0
    %vm240 = vcmask 130048
    %241 = vst.msk [vmem:[#allocation8] sm:$0xff] %vm240, %v237
    // Predicated region
    $region34: #{tpu_custom_call.1} parent=1 // pred_check
      _
    $region35: #{tpu_custom_call.1} parent=1 // pred_check_branch
      %243 = sbr.rel (0) target = $region37
    $region36: #{tpu_custom_call.1} parent=1 // pred_region
      %s245 = ssub.s32 128, 128
      %246 = vsyncadd [#allocation4], %s245
      %s248 = sshll.u32 [#allocation8], 4
      %s249 = int_to_ptr.vmem [resolvable:$true] %s248
      %251 = dma.vmem_to_hbm [thread:$0]  %s249, 128, %s5, [#allocation4]
    $region37: #{tpu_custom_call.1} parent=1 // pred_fallthru
      _
    // Predicated region
    $region38: #{tpu_custom_call.1} parent=1 // pred_check
      _
    $region39: #{tpu_custom_call.1} parent=1 // pred_check_branch
      %253 = sbr.rel (0) target = $region41
    $region40: #{tpu_custom_call.1} parent=1 // pred_region
      %254 = dma.done [#allocation4], 128
    $region41: #{tpu_custom_call.1} parent=1 // pred_fallthru
      _
    %255 = vsyncpa [#allocation3], 1
    %256 = vsyncpa [#allocation6], 1
    %257 = vsyncpa [#allocation4], 1

</llo_original>
